<compile_context>
chip_gen: v7x
topology: tpu7x:2x2x1
jax: 0.10.0
libtpu: 0.0.40
codegen_flags: <defaults>
</compile_context>

<pallas_src>
import functools

import jax
import jax.numpy as jnp
from jax.experimental import pallas as pl
from jax.experimental.pallas import tpu as pltpu


def _round_up(x, m):
    return ((x + m - 1) // m) * m


def _device_params():
    """(num_partials, target_block_bytes, vmem_limit_bytes) per TPU generation."""
    try:
        kind = jax.devices()[0].device_kind.lower()
    except Exception:  # defensive: fall through to conservative defaults
        kind = ""
    if "v7" in kind or "7x" in kind:   # 2 TensorCores, 64 MiB VMEM per core
        return 2, 4 << 20, 32 << 20
    if "v6" in kind:                   # 1 TensorCore, 128 MiB VMEM
        return 1, 8 << 20, 64 << 20
    if "v5" in kind:                   # 1 TensorCore, 128 MiB VMEM, slow HBM
        return 1, 16 << 20, 64 << 20
    return 1, 4 << 20, 32 << 20        # unknown chip: stay conservative


def _tv_kernel(x_ref, hmask_ref, vmask_ref, out_ref, acc_ref, *,
               width, length, tb, steps, nc, needs_row_mask):
    i = pl.program_id(1)

    @pl.when(i == 0)
    def _():
        acc_ref[...] = jnp.zeros_like(acc_ref)

    x = x_ref[...].astype(jnp.float32)                     # (tb, L), L = H*W

    if needs_row_mask:
        # Zero out whole planes past the real plane count (partial last block
        # or clamped duplicate blocks): diffs never cross planes, so zeroed
        # planes contribute exactly 0 to the TV sum.
        block = pl.program_id(0) * steps + i               # unclamped block id
        rows = block * tb + jax.lax.broadcasted_iota(jnp.int32, (tb, 1), 0)
        x = jnp.where(rows < nc, x, 0.0)

    # Flat neighbours: x_p1[i] = x[(i+1) % L], x_pw[i] = x[(i+W) % L].
    x_p1 = pltpu.roll(x, length - 1, axis=1)
    x_pw = pltpu.roll(x, length - width, axis=1)

    # Masks are loop-invariant (1, L) f32 inputs, broadcast over sublanes.
    d = (jnp.abs(x_p1 - x) * hmask_ref[...]
         + jnp.abs(x_pw - x) * vmask_ref[...])             # (tb, L)

    # Deferred sublane reduction: fold tb rows into 8 accumulator rows with
    # plain VPU adds; the cross-sublane/lane reduce happens once at the end.
    acc_ref[...] += d.reshape(tb // 8, 8, length).sum(axis=0)

    @pl.when(i == pl.num_programs(1) - 1)
    def _():
        out_ref[0, 0] = jnp.sum(acc_ref[...])


def total_variation_loss(img, weight=1.0):
    # Mirror the PyTorch dim-promotion rules.
    if img.ndim == 2:
        img = img[None, None]
    elif img.ndim == 3:
        img = img[None]
    n, c, h, w = img.shape
    length = h * w
    nc = n * c

    num_partials, target_block_bytes, vmem_limit = _device_params()

    # Lane-dense, plane-flattened layout: one row per (n, c) plane.
    flat = img.reshape(nc, length)
    itemsize = flat.dtype.itemsize
    bytes_per_plane = length * itemsize

    # VMEM budget: double-buffered input block + resident masks + accumulator.
    acc_bytes = 8 * length * 4
    mask_bytes = 2 * 2 * length * 4
    budget = (vmem_limit * 3) // 4
    avail = budget - acc_bytes - mask_bytes
    if avail < 2 * 8 * bytes_per_plane:
        # TODO(synk): tile H with a 1-row (W-element) halo per tile so planes
        # too large for whole-plane blocks can stream through VMEM.
        raise NotImplementedError(
            f"plane with {length} elements is too large for this TV kernel")

    tb = min(target_block_bytes, avail // 2) // bytes_per_plane
    tb = max(8, (tb // 8) * 8)
    tb = min(tb, _round_up(nc, 8))

    total_blocks = pl.cdiv(nc, tb)
    num_partials = min(num_partials, total_blocks)
    steps = pl.cdiv(total_blocks, num_partials)
    needs_row_mask = (num_partials * steps * tb) > nc

    # Loop-invariant diff masks (computed once, tiny).
    cols = jnp.arange(length, dtype=jnp.int32)
    hmask = ((cols % w) != (w - 1)).astype(jnp.float32).reshape(1, length)
    vmask = (cols < (length - w)).astype(jnp.float32).reshape(1, length)

    kernel = functools.partial(
        _tv_kernel, width=w, length=length, tb=tb, steps=steps, nc=nc,
        needs_row_mask=needs_row_mask)

    last_block = total_blocks - 1
    x_index_map = lambda p, i: (jnp.minimum(p * steps + i, last_block), 0)

    cost = pl.CostEstimate(
        flops=6 * nc * length,
        transcendentals=0,
        bytes_accessed=nc * length * itemsize + 2 * length * 4 + num_partials * 4,
    )

    partials = pl.pallas_call(
        kernel,
        out_shape=jax.ShapeDtypeStruct((num_partials, 1), jnp.float32),
        grid=(num_partials, steps),
        in_specs=[
            pl.BlockSpec((tb, length), x_index_map),
            pl.BlockSpec((1, length), lambda p, i: (0, 0)),
            pl.BlockSpec((1, length), lambda p, i: (0, 0)),
        ],
        out_specs=pl.BlockSpec(
            (1, 1), lambda p, i: (p, 0),
            memory_space=pltpu.MemorySpace.SMEM),
        scratch_shapes=[pltpu.VMEM((8, length), jnp.float32)],
        compiler_params=pltpu.CompilerParams(
            dimension_semantics=("parallel", "arbitrary"),
            vmem_limit_bytes=vmem_limit,
        ),
        cost_estimate=cost,
    )(flat, hmask, vmask)

    return weight * jnp.sum(partials) / n


if __name__ == "__main__":
    key = jax.random.PRNGKey(0)
    x = jax.random.normal(key, (2, 4, 16, 16), dtype=jnp.float32)

    loss = total_variation_loss(x, weight=1.0)
    loss = jax.block_until_ready(loss)

    # Pure-JAX reference for sanity checking (matches the PyTorch module).
    hd = jnp.sum(jnp.abs(x[:, :, :, 1:] - x[:, :, :, :-1]))
    vd = jnp.sum(jnp.abs(x[:, :, 1:, :] - x[:, :, :-1, :]))
    ref = (hd + vd) / x.shape[0]
    assert jnp.allclose(loss, ref, rtol=1e-5, atol=1e-5), (loss, ref)

    print("KERNEL_OK")
</pallas_src>

<mosaic_0001>
module attributes {stable_mosaic.version = 11 : i64} {
  func.func @_tv_kernel(%arg0: i32, %arg1: i32, %arg2: memref<8x256xf32, #tpu.memory_space<vmem>>, %arg3: memref<1x256xf32, #tpu.memory_space<vmem>>, %arg4: memref<1x256xf32, #tpu.memory_space<vmem>>, %arg5: memref<1x1xf32, #tpu.memory_space<smem>>, %arg6: memref<8x256xf32, #tpu.memory_space<vmem>>) attributes {dimension_semantics = [#tpu.dimension_semantics<parallel>, #tpu.dimension_semantics<arbitrary>], iteration_bounds = array<i64: 1, 1>, scalar_prefetch = 0 : i64, scratch_operands = 1 : i64, tpu.core_type = #tpu.core_type<tc>, window_params = [{transform_indices = @transform_0, window_bounds = array<i64: 8, 256>}, {pipeline_mode = #tpu.pipeline_mode<synchronous>, transform_indices = @transform_1, window_bounds = array<i64: 1, 256>}, {pipeline_mode = #tpu.pipeline_mode<synchronous>, transform_indices = @transform_2, window_bounds = array<i64: 1, 256>}, {transform_indices = @transform_3, window_bounds = array<i64: 1, 1>}]} {
    %c0_i32 = arith.constant 0 : i32
    %0 = arith.cmpi eq, %arg1, %c0_i32 : i32
    %1 = arith.extui %0 : i1 to i32
    %c0_i32_0 = arith.constant 0 : i32
    %2 = arith.cmpi ne, %1, %c0_i32_0 : i32
    scf.if %2 {
      %cst_12 = arith.constant 0.000000e+00 : f32
      %25 = vector.broadcast %cst_12 : f32 to vector<8x256xf32>
      %c0_13 = arith.constant 0 : index
      %c0_14 = arith.constant 0 : index
      %26 = vector.load %arg6[%c0_13, %c0_14] : memref<8x256xf32, #tpu.memory_space<vmem>>, vector<8x256xf32>
      tpu.vector_store %arg6[%c0_13, %c0_14], %25 {strides = array<i32>} : memref<8x256xf32, #tpu.memory_space<vmem>>, vector<8x256xf32>,
    } else {
    }
    %c0 = arith.constant 0 : index
    %c0_1 = arith.constant 0 : index
    %3 = vector.load %arg2[%c0, %c0_1] : memref<8x256xf32, #tpu.memory_space<vmem>>, vector<8x256xf32>
    %c255_i32 = arith.constant 255 : i32
    %4 = tpu.dynamic_rotate %3 by %c255_i32 dim 1 : vector<8x256xf32>, i32 -> vector<8x256xf32>
    %c240_i32 = arith.constant 240 : i32
    %5 = tpu.dynamic_rotate %3 by %c240_i32 dim 1 : vector<8x256xf32>, i32 -> vector<8x256xf32>
    %6 = arith.subf %4, %3 : vector<8x256xf32>
    %7 = math.absf %6 : vector<8x256xf32>
    %c0_2 = arith.constant 0 : index
    %c0_3 = arith.constant 0 : index
    %8 = vector.load %arg3[%c0_2, %c0_3] : memref<1x256xf32, #tpu.memory_space<vmem>>, vector<1x256xf32>
    %9 = vector.broadcast %8 : vector<1x256xf32> to vector<8x256xf32>
    %10 = arith.mulf %7, %9 : vector<8x256xf32>
    %11 = arith.subf %5, %3 : vector<8x256xf32>
    %12 = math.absf %11 : vector<8x256xf32>
    %c0_4 = arith.constant 0 : index
    %c0_5 = arith.constant 0 : index
    %13 = vector.load %arg4[%c0_4, %c0_5] : memref<1x256xf32, #tpu.memory_space<vmem>>, vector<1x256xf32>
    %14 = vector.broadcast %13 : vector<1x256xf32> to vector<8x256xf32>
    %15 = arith.mulf %12, %14 : vector<8x256xf32>
    %16 = arith.addf %10, %15 : vector<8x256xf32>
    %c0_6 = arith.constant 0 : index
    %c0_7 = arith.constant 0 : index
    %17 = vector.load %arg6[%c0_6, %c0_7] : memref<8x256xf32, #tpu.memory_space<vmem>>, vector<8x256xf32>
    %18 = vector.shape_cast %16 : vector<8x256xf32> to vector<1x8x256xf32>
    %cst = arith.constant dense<0.000000e+00> : vector<8x256xf32>
    %19 = vector.multi_reduction <add>, %18, %cst [0] : vector<1x8x256xf32> to vector<8x256xf32>
    %20 = arith.addf %17, %19 : vector<8x256xf32>
    %c0_8 = arith.constant 0 : index
    %c0_9 = arith.constant 0 : index
    %21 = vector.load %arg6[%c0_8, %c0_9] : memref<8x256xf32, #tpu.memory_space<vmem>>, vector<8x256xf32>
    tpu.vector_store %arg6[%c0_8, %c0_9], %20 {strides = array<i32>} : memref<8x256xf32, #tpu.memory_space<vmem>>, vector<8x256xf32>,
    %c0_i32_10 = arith.constant 0 : i32
    %22 = arith.cmpi eq, %arg1, %c0_i32_10 : i32
    %23 = arith.extui %22 : i1 to i32
    %c0_i32_11 = arith.constant 0 : i32
    %24 = arith.cmpi ne, %23, %c0_i32_11 : i32
    scf.if %24 {
      %c0_12 = arith.constant 0 : index
      %c0_13 = arith.constant 0 : index
      %25 = vector.load %arg6[%c0_12, %c0_13] : memref<8x256xf32, #tpu.memory_space<vmem>>, vector<8x256xf32>
      %26 = vector.shape_cast %25 : vector<8x256xf32> to vector<1x8x256xf32>
      %cst_14 = arith.constant dense<0.000000e+00> : vector<1xf32>
      %27 = vector.multi_reduction <add>, %26, %cst_14 [1, 2] : vector<1x8x256xf32> to vector<1xf32>
      %28 = vector.shape_cast %27 : vector<1xf32> to vector<1x1x1xf32>
      %29 = vector.extract %28[0, 0, 0] : f32 from vector<1x1x1xf32>
      %c0_15 = arith.constant 0 : index
      %c0_16 = arith.constant 0 : index
      %30 = memref.load %arg5[%c0_15, %c0_16] : memref<1x1xf32, #tpu.memory_space<smem>>
      memref.store %29, %arg5[%c0_15, %c0_16] : memref<1x1xf32, #tpu.memory_space<smem>>
    } else {
    }
    return
  }
  func.func @transform_0(%arg0: i32, %arg1: i32) -> (i32, i32) {
    %c1_i32 = arith.constant 1 : i32
    %0 = arith.muli %arg0, %c1_i32 : i32
    %1 = arith.addi %0, %arg1 : i32
    %c0_i32 = arith.constant 0 : i32
    %2 = arith.minsi %1, %c0_i32 : i32
    %c0_i32_0 = arith.constant 0 : i32
    %c0_i32_1 = arith.constant 0 : i32
    return %2, %c0_i32_0 : i32, i32
  }
  func.func @transform_1(%arg0: i32, %arg1: i32) -> (i32, i32) {
    %c0_i32 = arith.constant 0 : i32
    %c0_i32_0 = arith.constant 0 : i32
    %c0_i32_1 = arith.constant 0 : i32
    return %c0_i32, %c0_i32_0 : i32, i32
  }
  func.func @transform_2(%arg0: i32, %arg1: i32) -> (i32, i32) {
    %c0_i32 = arith.constant 0 : i32
    %c0_i32_0 = arith.constant 0 : i32
    %c0_i32_1 = arith.constant 0 : i32
    return %c0_i32, %c0_i32_0 : i32, i32
  }
  func.func @transform_3(%arg0: i32, %arg1: i32) -> (i32, i32) {
    %c0_i32 = arith.constant 0 : i32
    %c0_i32_0 = arith.constant 0 : i32
    return %arg0, %c0_i32 : i32, i32
  }
}

</mosaic_0001>

<llo_original>
// kernel: tpu_custom_call.1
$region0: #{tpu_custom_call.1}
  #allocation0 [shape = 'u32[]', space=smem, size = 0x4, offset = 0x4, fixed_abs, tag = 'smem constant byte address 0x4 - core index']
  #allocation1 [shape = 'u32[144,128]{1,0:T(1,128)}', space=vmem, size = 0x12000, scoped, tag = 'internal scratch']
  #allocation2 [shape = 'f32[8,256]{1,0:T(8,128)}', space=vmem, size = 0x2000, scoped, tag = 'scratch operand']
  %s0 = inlined_call_operand.hbm [shape: f32[8,256], index: 0, kind: input, shape index: {}]
  %s1 = inlined_call_operand.vmem [shape: f32[1,256], index: 1, kind: input, shape index: {}]
  %s2 = inlined_call_operand.vmem [shape: f32[1,256], index: 2, kind: input, shape index: {}]
  %s3 = inlined_call_operand.hbm [shape: f32[1,1], index: 3, kind: output, shape index: {}]
  %s4 = sld [smem:[#allocation0]]
  $region34: #{tpu_custom_call.1} parent=0
    _
  %s6 = ssub.s32 1, %s4
  %s7 = scalar_select 0, %s6, %s4
  $region1: #{tpu_custom_call.1} parent=0
    #allocation3 [shape = 'u8[8192]{0}', space=vmem, size = 0x2000, scoped, tag = 'input window, operand 0, single buffered']
    #allocation4 [shape = 's32[1]{0}', space=sflag, size = 0x4, scoped, tag = 'scoped memory for tpu_custom_call.1']
    #allocation5 [shape = 's32[1]{0}', space=sflag, size = 0x4, scoped, tag = 'scoped memory for tpu_custom_call.1']
    #allocation6 [shape = 'u8[512]{0}', space=smem, size = 0x200, scoped, tag = 'output window, operand 0, single buffered']
    %8 = vsyncpa [#allocation4], 0
    %9 = vsyncpa [#allocation5], 0
    // Predicated region
    $region2: #{tpu_custom_call.1} parent=1 // pred_check
      _
    $region3: #{tpu_custom_call.1} parent=1 // pred_check_branch
      %11 = sbr.rel (0) target = $region5
    $region4: #{tpu_custom_call.1} parent=1 // pred_region
      %s12 = sadd.s32 0, 0
      %p13 = scmp.lt.s32.totalorder %s12, 0
      %s14 = scalar_select %p13, %s12, 0
      %s16 = ssub.s32 256, 256
      %17 = vsyncadd [#allocation4], %s16
      %s18 = smul.addr %s14, 2
      %s19 = smul.addr %s18, 128
      %s20 = scalar_lea.hbm %s0, %s19
      %s22 = sshll.u32 [#allocation3], 4
      %s23 = int_to_ptr.vmem [resolvable:$true] %s22
      %25 = dma.hbm_to_vmem [thread:$0]  %s20, 256, %s23, [#allocation4]
    $region5: #{tpu_custom_call.1} parent=1 // pred_fallthru
      _
    // Predicated region
    $region6: #{tpu_custom_call.1} parent=1 // pred_check
      _
    $region7: #{tpu_custom_call.1} parent=1 // pred_check_branch
      %27 = sbr.rel (0) target = $region9
    $region8: #{tpu_custom_call.1} parent=1 // pred_region
      _
    $region9: #{tpu_custom_call.1} parent=1 // pred_fallthru
      _
    // Predicated region
    $region10: #{tpu_custom_call.1} parent=1 // pred_check
      _
    $region11: #{tpu_custom_call.1} parent=1 // pred_check_branch
      %29 = sbr.rel (0) target = $region13
    $region12: #{tpu_custom_call.1} parent=1 // pred_region
      _
    $region13: #{tpu_custom_call.1} parent=1 // pred_fallthru
      _
    // Predicated region
    $region14: #{tpu_custom_call.1} parent=1 // pred_check
      _
    $region15: #{tpu_custom_call.1} parent=1 // pred_check_branch
      %31 = sbr.rel (0) target = $region17
    $region16: #{tpu_custom_call.1} parent=1 // pred_region
      %32 = dma.done [#allocation4], 256
    $region17: #{tpu_custom_call.1} parent=1 // pred_fallthru
      _
    %s33 = sadd.s32 0, 0
    %p34 = scmp.lt.s32.totalorder %s33, 0
    %s35 = scalar_select %p34, %s33, 0
    %p36 = scmp.eq.s32.totalorder 0, 0
    // Predicated region
    $region18: #{tpu_custom_call.1} parent=1 // pred_check
      %p37 = pneg %p36
    $region19: #{tpu_custom_call.1} parent=1 // pred_check_branch
      %39 = sbr.rel (%p37) target = $region21
    $region20: #{tpu_custom_call.1} parent=1 // pred_region
      %40 = vst [vmem:[#allocation2] sm:$0xff] 0.0
      %41 = vst [vmem:[#allocation2 + $0x8] sm:$0xff] 0.0
    $region21: #{tpu_custom_call.1} parent=1 // pred_fallthru
      _
    %v42 = vld [vmem:[#allocation3] sm:$0xff]
    %v43 = vld [vmem:[#allocation3 + $0x8] sm:$0xff]
    %44 = vrot.lane.b32.xlu0 %v42, 127
    %v45 = vpop.permute.xlu0 %44
    %46 = vrot.lane.b32.xlu0 %v43, 127
    %v47 = vpop.permute.xlu0 %46
    %v48 = vlaneseq
    %v49 = vand.u32 %v48, 127
    %vm50 = vcmp.lt.s32.totalorder %v49, 127
    %v51 = vsel %vm50, %v45, %v47
    %v52 = vsel %vm50, %v47, %v45
    %53 = vrot.lane.b32.xlu0 %v42, 112
    %v54 = vpop.permute.xlu0 %53
    %55 = vrot.lane.b32.xlu0 %v43, 112
    %v56 = vpop.permute.xlu0 %55
    %vm57 = vcmp.lt.s32.totalorder %v49, 112
    %v58 = vsel %vm57, %v54, %v56
    %v59 = vsel %vm57, %v56, %v54
    %v60 = vsub.f32 %v51, %v42
    %v61 = vsub.f32 %v52, %v43
    %v62 = vand.u32 2147483647, %v60
    %v63 = vand.u32 2147483647, %v61
    %v64 = vld [vmem:[%s1] sm:$0x3]
    %v66 = vlaneseq
    %v67 = vshrl.u32 %v66, 7
    %v68 = vsub.s32 0, %v67
    %v69 = vrot.slane %v64, %v68
    %v70 = vlaneseq
    %v71 = vshrl.u32 %v70, 7
    %v72 = vsub.s32 1, %v71
    %v73 = vrot.slane %v64, %v72
    %v76 = vmul.f32 %v62, %v69
    %v77 = vmul.f32 %v63, %v73
    %v78 = vsub.f32 %v58, %v42
    %v79 = vsub.f32 %v59, %v43
    %v80 = vand.u32 2147483647, %v78
    %v81 = vand.u32 2147483647, %v79
    %v82 = vld [vmem:[%s2] sm:$0x3]
    %v84 = vlaneseq
    %v85 = vshrl.u32 %v84, 7
    %v86 = vsub.s32 0, %v85
    %v87 = vrot.slane %v82, %v86
    %v88 = vlaneseq
    %v89 = vshrl.u32 %v88, 7
    %v90 = vsub.s32 1, %v89
    %v91 = vrot.slane %v82, %v90
    %v94 = vmul.f32 %v80, %v87
    %v95 = vmul.f32 %v81, %v91
    %v96 = vadd.f32 %v76, %v94
    %v97 = vadd.f32 %v77, %v95
    %v98 = vld [vmem:[#allocation2] sm:$0xff]
    %v99 = vld [vmem:[#allocation2 + $0x8] sm:$0xff]
    %v100 = vadd.f32 %v96, 0.0
    %v101 = vadd.f32 %v97, 0.0
    %v102 = vadd.f32 %v98, %v100
    %v103 = vadd.f32 %v99, %v101
    %104 = vst [vmem:[#allocation2] sm:$0xff] %v102
    %105 = vst [vmem:[#allocation2 + $0x8] sm:$0xff] %v103
    // Predicated region
    $region22: #{tpu_custom_call.1} parent=1 // pred_check
      %p106 = pneg %p36
    $region23: #{tpu_custom_call.1} parent=1 // pred_check_branch
      %108 = sbr.rel (%p106) target = $region25
    $region24: #{tpu_custom_call.1} parent=1 // pred_region
      %v109 = vld [vmem:[#allocation2] sm:$0xff]
      %v110 = vld [vmem:[#allocation2 + $0x8] sm:$0xff]
      %v111 = vadd.f32 %v109, %v110
      %112 = vadd.xlane.f32.xlu0 %v111
      %v113 = vpop.xlane.xlu0 %112
      %v114 = vrot.slane %v113, 4
      %v115 = vadd.f32 %v113, %v114
      %v116 = vrot.slane %v115, 2
      %v117 = vadd.f32 %v115, %v116
      %v118 = vrot.slane %v117, 1
      %v119 = vadd.f32 %v117, %v118
      %s120 = vtos %v119
      %s121 = scalar_lea.smem [#allocation6], 0
      %122 = sst [smem:[%s121]] %s120
    $region25: #{tpu_custom_call.1} parent=1 // pred_fallthru
      _
    // Predicated region
    $region26: #{tpu_custom_call.1} parent=1 // pred_check
      _
    $region27: #{tpu_custom_call.1} parent=1 // pred_check_branch
      %124 = sbr.rel (0) target = $region29
    $region28: #{tpu_custom_call.1} parent=1 // pred_region
      %s126 = ssub.s32 16, 16
      %127 = vsyncadd [#allocation5], %s126
      %130 = dma.smem_to_hbm [#allocation6], 16, %s3, [#allocation5]
    $region29: #{tpu_custom_call.1} parent=1 // pred_fallthru
      _
    // Predicated region
    $region30: #{tpu_custom_call.1} parent=1 // pred_check
      _
    $region31: #{tpu_custom_call.1} parent=1 // pred_check_branch
      %132 = sbr.rel (0) target = $region33
    $region32: #{tpu_custom_call.1} parent=1 // pred_region
      %133 = dma.done [#allocation5], 16
    $region33: #{tpu_custom_call.1} parent=1 // pred_fallthru
      _
    %134 = sfence
    %135 = vsyncpa [#allocation4], 1
    %136 = vsyncpa [#allocation5], 1

</llo_original>
